<compile_context>
chip_gen: v5e
topology: v5e:2x2
jax: 0.10.0
libtpu: 0.0.40
codegen_flags: <defaults>
</compile_context>

<pallas_src>
import jax
import jax.numpy as jnp
from jax.experimental import pallas as pl
from jax.experimental.pallas import tpu as pltpu


def mlp_kernel(x_ref, w1_ref, b1_ref, w2_ref, b2_ref, w3_ref, b3_ref, o_ref):
    """One batch tile per grid step; all three matmuls + biases + ReLUs fused."""
    compute_dtype = w1_ref.dtype  # f32 or bf16; accumulation is always f32.

    x = x_ref[...]
    h = jnp.dot(x, w1_ref[...], preferred_element_type=jnp.float32) + b1_ref[...]
    h = jnp.maximum(h, 0.0).astype(compute_dtype)

    h = jnp.dot(h, w2_ref[...], preferred_element_type=jnp.float32) + b2_ref[...]
    h = jnp.maximum(h, 0.0).astype(compute_dtype)

    out = jnp.dot(h, w3_ref[...], preferred_element_type=jnp.float32) + b3_ref[...]
    o_ref[...] = out.astype(o_ref.dtype)


def _round_up(n, m):
    return ((n + m - 1) // m) * m


def mlp_forward(x, params, *, tile_b=128, compute_dtype=jnp.float32):
    """x: (B, input_dim) float32. params: w1,b1,w2,b2,w3,b3 (w: (in,out), b: (1,out))."""
    B, input_dim = x.shape
    hidden_dim = params["w1"].shape[1]
    output_dim = params["w3"].shape[1]

    # Sublane granule: 8 rows for 32-bit operands, 16 for bf16 (packed sublanes).
    itemsize = jnp.dtype(compute_dtype).itemsize
    row_gran = 8 * (4 // itemsize)

    # Largest batch tile actually needed (single step at small B), capped at
    # `tile_b` (128 fills the MXU; larger only lengthens the serial grid).
    eff_tile_b = max(row_gran, min(_round_up(tile_b, row_gran), _round_up(B, row_gran)))
    b_pad = _round_up(B, eff_tile_b)

    # Lane-dense output: pad the (tiny) last layer out to a multiple of 128 lanes.
    n_pad = _round_up(output_dim, 128)

    x_p = x.astype(compute_dtype)
    if b_pad != B:
        x_p = jnp.pad(x_p, ((0, b_pad - B), (0, 0)))

    w1 = params["w1"].astype(compute_dtype)
    w2 = params["w2"].astype(compute_dtype)
    w3 = params["w3"].astype(compute_dtype)
    # Biases stay f32 (added to the f32 accumulator).
    b1 = params["b1"].astype(jnp.float32)
    b2 = params["b2"].astype(jnp.float32)
    b3 = params["b3"].astype(jnp.float32)
    if n_pad != output_dim:
        w3 = jnp.pad(w3, ((0, 0), (0, n_pad - output_dim)))
        b3 = jnp.pad(b3, ((0, 0), (0, n_pad - output_dim)))

    grid = (b_pad // eff_tile_b,)

    # Weights/biases are small; keep them fully resident (same block every step).
    full = lambda shape: pl.BlockSpec(shape, lambda i: (0, 0))

    out = pl.pallas_call(
        mlp_kernel,
        out_shape=jax.ShapeDtypeStruct((b_pad, n_pad), jnp.float32),
        grid_spec=pltpu.PrefetchScalarGridSpec(
            num_scalar_prefetch=0,
            grid=grid,
            in_specs=[
                pl.BlockSpec((eff_tile_b, input_dim), lambda i: (i, 0)),  # x tile
                full((input_dim, hidden_dim)),                            # w1
                full((1, hidden_dim)),                                    # b1
                full((hidden_dim, hidden_dim)),                           # w2
                full((1, hidden_dim)),                                    # b2
                full((hidden_dim, n_pad)),                                # w3 (lane-padded)
                full((1, n_pad)),                                         # b3 (lane-padded)
            ],
            out_specs=pl.BlockSpec((eff_tile_b, n_pad), lambda i: (i, 0)),
        ),
        compiler_params=pltpu.CompilerParams(
            dimension_semantics=("parallel",),  # batch tiles shard across TCs on v7x
        ),
    )(x_p, w1, b1, w2, b2, w3, b3)

    return out[:B, :output_dim]


def init_params(key, input_dim, hidden_dim, output_dim):
    """Deterministic init mimicking nn.Linear's U(-1/sqrt(fan_in), 1/sqrt(fan_in))."""
    ks = jax.random.split(key, 6)

    def linear(kw, kb, fan_in, fan_out):
        bound = 1.0 / jnp.sqrt(fan_in)
        w = jax.random.uniform(kw, (fan_in, fan_out), jnp.float32, -bound, bound)
        b = jax.random.uniform(kb, (1, fan_out), jnp.float32, -bound, bound)
        return w, b

    w1, b1 = linear(ks[0], ks[1], input_dim, hidden_dim)
    w2, b2 = linear(ks[2], ks[3], hidden_dim, hidden_dim)
    w3, b3 = linear(ks[4], ks[5], hidden_dim, output_dim)
    return {"w1": w1, "b1": b1, "w2": w2, "b2": b2, "w3": w3, "b3": b3}


def mlp_reference(x, p, compute_dtype=jnp.float32):
    cd = compute_dtype
    h = jnp.dot(x.astype(cd), p["w1"].astype(cd), preferred_element_type=jnp.float32) + p["b1"]
    h = jnp.maximum(h, 0.0).astype(cd)
    h = jnp.dot(h, p["w2"].astype(cd), preferred_element_type=jnp.float32) + p["b2"]
    h = jnp.maximum(h, 0.0).astype(cd)
    return jnp.dot(h, p["w3"].astype(cd), preferred_element_type=jnp.float32) + p["b3"]


if __name__ == "__main__":
    key = jax.random.PRNGKey(0)
    k_x, k_p = jax.random.split(key)

    B, input_dim, hidden_dim, output_dim = 16, 32, 256, 1
    x = jax.random.normal(k_x, (B, input_dim), jnp.float32)
    params = init_params(k_p, input_dim, hidden_dim, output_dim)

    # f32 path (matches the PyTorch-style reference).
    out = mlp_forward(x, params)
    out = jax.block_until_ready(out)
    ref = mlp_reference(x, params)
    assert out.shape == (B, output_dim), out.shape
    assert jnp.allclose(out, ref, atol=1e-5, rtol=1e-5), float(jnp.abs(out - ref).max())

    # bf16 operands (v6e/v7x MXU-native), f32 accumulation; checked vs matched bf16 reference.
    out_bf16 = mlp_forward(x, params, compute_dtype=jnp.bfloat16)
    out_bf16 = jax.block_until_ready(out_bf16)
    ref_bf16 = mlp_reference(x, params, compute_dtype=jnp.bfloat16)
    assert out_bf16.shape == (B, output_dim), out_bf16.shape
    assert jnp.allclose(out_bf16, ref_bf16, atol=2e-2, rtol=2e-2), \
        float(jnp.abs(out_bf16 - ref_bf16).max())

    print("KERNEL_OK")
</pallas_src>

<mosaic_0001>
module attributes {stable_mosaic.version = 11 : i64} {
  func.func @mlp_kernel(%arg0: i32, %arg1: memref<16x32xf32, #tpu.memory_space<vmem>>, %arg2: memref<32x256xf32, #tpu.memory_space<vmem>>, %arg3: memref<1x256xf32, #tpu.memory_space<vmem>>, %arg4: memref<256x256xf32, #tpu.memory_space<vmem>>, %arg5: memref<1x256xf32, #tpu.memory_space<vmem>>, %arg6: memref<256x128xf32, #tpu.memory_space<vmem>>, %arg7: memref<1x128xf32, #tpu.memory_space<vmem>>, %arg8: memref<16x128xf32, #tpu.memory_space<vmem>>) attributes {dimension_semantics = [#tpu.dimension_semantics<parallel>], iteration_bounds = array<i64: 1>, scalar_prefetch = 0 : i64, scratch_operands = 0 : i64, tpu.core_type = #tpu.core_type<tc>, window_params = [{transform_indices = @transform_0, window_bounds = array<i64: 16, 32>}, {pipeline_mode = #tpu.pipeline_mode<synchronous>, transform_indices = @transform_1, window_bounds = array<i64: 32, 256>}, {pipeline_mode = #tpu.pipeline_mode<synchronous>, transform_indices = @transform_2, window_bounds = array<i64: 1, 256>}, {pipeline_mode = #tpu.pipeline_mode<synchronous>, transform_indices = @transform_3, window_bounds = array<i64: 256, 256>}, {pipeline_mode = #tpu.pipeline_mode<synchronous>, transform_indices = @transform_4, window_bounds = array<i64: 1, 256>}, {pipeline_mode = #tpu.pipeline_mode<synchronous>, transform_indices = @transform_5, window_bounds = array<i64: 256, 128>}, {pipeline_mode = #tpu.pipeline_mode<synchronous>, transform_indices = @transform_6, window_bounds = array<i64: 1, 128>}, {transform_indices = @transform_7, window_bounds = array<i64: 16, 128>}]} {
    %c0 = arith.constant 0 : index
    %c0_0 = arith.constant 0 : index
    %0 = vector.load %arg1[%c0, %c0_0] : memref<16x32xf32, #tpu.memory_space<vmem>>, vector<16x32xf32>
    %c0_1 = arith.constant 0 : index
    %c0_2 = arith.constant 0 : index
    %1 = vector.load %arg2[%c0_1, %c0_2] : memref<32x256xf32, #tpu.memory_space<vmem>>, vector<32x256xf32>
    %cst = arith.constant dense<0.000000e+00> : vector<16x256xf32>
    %2 = tpu.matmul %0, %1, %cst {dimension_numbers = #tpu.dot_dimension_numbers<[1], [0], [0], [1], [0, 0, 1, 1], [], []>} : vector<16x32xf32>, vector<32x256xf32>, vector<16x256xf32> -> vector<16x256xf32>
    %c0_3 = arith.constant 0 : index
    %c0_4 = arith.constant 0 : index
    %3 = vector.load %arg3[%c0_3, %c0_4] : memref<1x256xf32, #tpu.memory_space<vmem>>, vector<1x256xf32>
    %4 = vector.broadcast %3 : vector<1x256xf32> to vector<16x256xf32>
    %5 = arith.addf %2, %4 : vector<16x256xf32>
    %cst_5 = arith.constant 0.000000e+00 : f32
    %6 = vector.broadcast %cst_5 : f32 to vector<16x256xf32>
    %7 = arith.maximumf %5, %6 : vector<16x256xf32>
    %c0_6 = arith.constant 0 : index
    %c0_7 = arith.constant 0 : index
    %8 = vector.load %arg4[%c0_6, %c0_7] : memref<256x256xf32, #tpu.memory_space<vmem>>, vector<256x256xf32>
    %cst_8 = arith.constant dense<0.000000e+00> : vector<16x256xf32>
    %9 = tpu.matmul %7, %8, %cst_8 {dimension_numbers = #tpu.dot_dimension_numbers<[1], [0], [0], [1], [0, 0, 1, 1], [], []>} : vector<16x256xf32>, vector<256x256xf32>, vector<16x256xf32> -> vector<16x256xf32>
    %c0_9 = arith.constant 0 : index
    %c0_10 = arith.constant 0 : index
    %10 = vector.load %arg5[%c0_9, %c0_10] : memref<1x256xf32, #tpu.memory_space<vmem>>, vector<1x256xf32>
    %11 = vector.broadcast %10 : vector<1x256xf32> to vector<16x256xf32>
    %12 = arith.addf %9, %11 : vector<16x256xf32>
    %cst_11 = arith.constant 0.000000e+00 : f32
    %13 = vector.broadcast %cst_11 : f32 to vector<16x256xf32>
    %14 = arith.maximumf %12, %13 : vector<16x256xf32>
    %c0_12 = arith.constant 0 : index
    %c0_13 = arith.constant 0 : index
    %15 = vector.load %arg6[%c0_12, %c0_13] : memref<256x128xf32, #tpu.memory_space<vmem>>, vector<256x128xf32>
    %cst_14 = arith.constant dense<0.000000e+00> : vector<16x128xf32>
    %16 = tpu.matmul %14, %15, %cst_14 {dimension_numbers = #tpu.dot_dimension_numbers<[1], [0], [0], [1], [0, 0, 1, 1], [], []>} : vector<16x256xf32>, vector<256x128xf32>, vector<16x128xf32> -> vector<16x128xf32>
    %c0_15 = arith.constant 0 : index
    %c0_16 = arith.constant 0 : index
    %17 = vector.load %arg7[%c0_15, %c0_16] : memref<1x128xf32, #tpu.memory_space<vmem>>, vector<1x128xf32>
    %18 = vector.broadcast %17 : vector<1x128xf32> to vector<16x128xf32>
    %19 = arith.addf %16, %18 : vector<16x128xf32>
    %c0_17 = arith.constant 0 : index
    %c0_18 = arith.constant 0 : index
    %20 = vector.load %arg8[%c0_17, %c0_18] : memref<16x128xf32, #tpu.memory_space<vmem>>, vector<16x128xf32>
    tpu.vector_store %arg8[%c0_17, %c0_18], %19 {strides = array<i32>} : memref<16x128xf32, #tpu.memory_space<vmem>>, vector<16x128xf32>,
    return
  }
  func.func @transform_0(%arg0: i32) -> (i32, i32) {
    %c0_i32 = arith.constant 0 : i32
    %c0_i32_0 = arith.constant 0 : i32
    return %arg0, %c0_i32 : i32, i32
  }
  func.func @transform_1(%arg0: i32) -> (i32, i32) {
    %c0_i32 = arith.constant 0 : i32
    %c0_i32_0 = arith.constant 0 : i32
    %c0_i32_1 = arith.constant 0 : i32
    return %c0_i32, %c0_i32_0 : i32, i32
  }
  func.func @transform_2(%arg0: i32) -> (i32, i32) {
    %c0_i32 = arith.constant 0 : i32
    %c0_i32_0 = arith.constant 0 : i32
    %c0_i32_1 = arith.constant 0 : i32
    return %c0_i32, %c0_i32_0 : i32, i32
  }
  func.func @transform_3(%arg0: i32) -> (i32, i32) {
    %c0_i32 = arith.constant 0 : i32
    %c0_i32_0 = arith.constant 0 : i32
    %c0_i32_1 = arith.constant 0 : i32
    return %c0_i32, %c0_i32_0 : i32, i32
  }
  func.func @transform_4(%arg0: i32) -> (i32, i32) {
    %c0_i32 = arith.constant 0 : i32
    %c0_i32_0 = arith.constant 0 : i32
    %c0_i32_1 = arith.constant 0 : i32
    return %c0_i32, %c0_i32_0 : i32, i32
  }
  func.func @transform_5(%arg0: i32) -> (i32, i32) {
    %c0_i32 = arith.constant 0 : i32
    %c0_i32_0 = arith.constant 0 : i32
    %c0_i32_1 = arith.constant 0 : i32
    return %c0_i32, %c0_i32_0 : i32, i32
  }
  func.func @transform_6(%arg0: i32) -> (i32, i32) {
    %c0_i32 = arith.constant 0 : i32
    %c0_i32_0 = arith.constant 0 : i32
    %c0_i32_1 = arith.constant 0 : i32
    return %c0_i32, %c0_i32_0 : i32, i32
  }
  func.func @transform_7(%arg0: i32) -> (i32, i32) {
    %c0_i32 = arith.constant 0 : i32
    %c0_i32_0 = arith.constant 0 : i32
    return %arg0, %c0_i32 : i32, i32
  }
}

</mosaic_0001>

<llo_original>
// kernel: tpu_custom_call.1
$region0: #{tpu_custom_call.1}
  #allocation0 [shape = 'u32[]', space=smem, size = 0x4, offset = 0x4, fixed_abs, tag = 'smem constant byte address 0x4 - core index']
  #allocation1 [shape = 'u32[72,128]{1,0:T(1,128)}', space=vmem, size = 0x9000, scoped, tag = 'internal scratch']
  %s0 = inlined_call_operand.hbm [shape: f32[16,32], index: 0, kind: input, shape index: {}]
  %s1 = inlined_call_operand.hbm [shape: f32[32,256], index: 1, kind: input, shape index: {}]
  %s2 = inlined_call_operand.hbm [shape: f32[1,256], index: 2, kind: input, shape index: {}]
  %s3 = inlined_call_operand.hbm [shape: f32[256,256], index: 3, kind: input, shape index: {}]
  %s4 = inlined_call_operand.vmem [shape: f32[1,256], index: 4, kind: input, shape index: {}]
  %s5 = inlined_call_operand.hbm [shape: f32[256,128], index: 5, kind: input, shape index: {}]
  %s6 = inlined_call_operand.vmem [shape: f32[1,128], index: 6, kind: input, shape index: {}]
  %s7 = inlined_call_operand.hbm [shape: f32[16,128], index: 7, kind: output, shape index: {}]
  %s8 = sld [smem:[#allocation0]]
  $region58: #{tpu_custom_call.1} parent=0
    _
  %s10 = ssub.s32 1, %s8
  %s11 = scalar_select 0, %s10, %s8
  $region1: #{tpu_custom_call.1} parent=0
    #allocation2 [shape = 'u8[8192]{0}', space=vmem, size = 0x2000, scoped, tag = 'input window, operand 0, single buffered']
    #allocation3 [shape = 's32[1]{0}', space=sflag, size = 0x4, scoped, tag = 'scoped memory for tpu_custom_call.1']
    #allocation4 [shape = 's32[1]{0}', space=sflag, size = 0x4, scoped, tag = 'scoped memory for tpu_custom_call.1']
    #allocation5 [shape = 'u8[32768]{0}', space=vmem, size = 0x8000, scoped, tag = 'input window, operand 1, single buffered']
    #allocation6 [shape = 's32[1]{0}', space=sflag, size = 0x4, scoped, tag = 'scoped memory for tpu_custom_call.1']
    #allocation7 [shape = 'u8[1024]{0}', space=vmem, size = 0x400, scoped, tag = 'input window, operand 2, single buffered']
    #allocation8 [shape = 'u8[262144]{0}', space=vmem, size = 0x40000, scoped, tag = 'input window, operand 3, single buffered']
    #allocation9 [shape = 's32[1]{0}', space=sflag, size = 0x4, scoped, tag = 'scoped memory for tpu_custom_call.1']
    #allocation10 [shape = 'u8[131072]{0}', space=vmem, size = 0x20000, scoped, tag = 'input window, operand 5, single buffered']
    #allocation11 [shape = 'u8[8192]{0}', space=vmem, size = 0x2000, scoped, tag = 'output window, operand 0, single buffered']
    %12 = vsyncpa [#allocation3], 0
    %13 = vsyncpa [#allocation6], 0
    %14 = vsyncpa [#allocation9], 0
    %15 = vsyncpa [#allocation4], 0
    // Predicated region
    $region2: #{tpu_custom_call.1} parent=1 // pred_check
      _
    $region3: #{tpu_custom_call.1} parent=1 // pred_check_branch
      %17 = sbr.rel (0) target = $region5
    $region4: #{tpu_custom_call.1} parent=1 // pred_region
      %19 = vsyncadd [#allocation3], 0
      %s20 = sshll.u32 %s0, 4
      %s21 = int_to_ptr.hbm [resolvable:$true] %s20
      %s22 = sshll.u32 [#allocation2], 4
      %s23 = int_to_ptr.vmem [resolvable:$true] %s22
      %28 = dma.hbm_to_vmem [thread:$0]  %s21, 256, %s23, [#allocation3], 128, 128, 8
    $region5: #{tpu_custom_call.1} parent=1 // pred_fallthru
      _
    // Predicated region
    $region6: #{tpu_custom_call.1} parent=1 // pred_check
      _
    $region7: #{tpu_custom_call.1} parent=1 // pred_check_branch
      %30 = sbr.rel (0) target = $region9
    $region8: #{tpu_custom_call.1} parent=1 // pred_region
      %32 = vsyncadd [#allocation6], 0
      %s33 = sshll.u32 %s1, 4
      %s34 = int_to_ptr.hbm [resolvable:$true] %s33
      %s35 = sshll.u32 [#allocation5], 4
      %s36 = int_to_ptr.vmem [resolvable:$true] %s35
      %41 = dma.hbm_to_vmem [thread:$0]  %s34, 1024, %s36, [#allocation6], 256, 256, 16
    $region9: #{tpu_custom_call.1} parent=1 // pred_fallthru
      _
    // Predicated region
    $region10: #{tpu_custom_call.1} parent=1 // pred_check
      _
    $region11: #{tpu_custom_call.1} parent=1 // pred_check_branch
      %43 = sbr.rel (0) target = $region13
    $region12: #{tpu_custom_call.1} parent=1 // pred_region
      %45 = vsyncadd [#allocation6], 0
      %s47 = sshll.u32 %s2, 4
      %s48 = int_to_ptr.hbm [resolvable:$true] %s47
      %s49 = sshll.u32 [#allocation7], 4
      %s50 = int_to_ptr.vmem [resolvable:$true] %s49
      %52 = dma.hbm_to_vmem [thread:$0]  %s48, 32, %s50, [#allocation6]
    $region13: #{tpu_custom_call.1} parent=1 // pred_fallthru
      _
    // Predicated region
    $region14: #{tpu_custom_call.1} parent=1 // pred_check
      _
    $region15: #{tpu_custom_call.1} parent=1 // pred_check_branch
      %54 = sbr.rel (0) target = $region17
    $region16: #{tpu_custom_call.1} parent=1 // pred_region
      %56 = vsyncadd [#allocation9], 0
      %s57 = sshll.u32 %s3, 4
      %s58 = int_to_ptr.hbm [resolvable:$true] %s57
      %s59 = sshll.u32 [#allocation8], 4
      %s60 = int_to_ptr.vmem [resolvable:$true] %s59
      %65 = dma.hbm_to_vmem [thread:$0]  %s58, 8192, %s60, [#allocation9], 256, 256, 16
    $region17: #{tpu_custom_call.1} parent=1 // pred_fallthru
      _
    // Predicated region
    $region18: #{tpu_custom_call.1} parent=1 // pred_check
      _
    $region19: #{tpu_custom_call.1} parent=1 // pred_check_branch
      %67 = sbr.rel (0) target = $region21
    $region20: #{tpu_custom_call.1} parent=1 // pred_region
      _
    $region21: #{tpu_custom_call.1} parent=1 // pred_fallthru
      _
    // Predicated region
    $region22: #{tpu_custom_call.1} parent=1 // pred_check
      _
    $region23: #{tpu_custom_call.1} parent=1 // pred_check_branch
      %69 = sbr.rel (0) target = $region25
    $region24: #{tpu_custom_call.1} parent=1 // pred_region
      %71 = vsyncadd [#allocation9], 0
      %s72 = sshll.u32 %s5, 4
      %s73 = int_to_ptr.hbm [resolvable:$true] %s72
      %s74 = sshll.u32 [#allocation10], 4
      %s75 = int_to_ptr.vmem [resolvable:$true] %s74
      %80 = dma.hbm_to_vmem [thread:$0]  %s73, 4096, %s75, [#allocation9], 128, 128, 8
    $region25: #{tpu_custom_call.1} parent=1 // pred_fallthru
      _
    // Predicated region
    $region26: #{tpu_custom_call.1} parent=1 // pred_check
      _
    $region27: #{tpu_custom_call.1} parent=1 // pred_check_branch
      %82 = sbr.rel (0) target = $region29
    $region28: #{tpu_custom_call.1} parent=1 // pred_region
      _
    $region29: #{tpu_custom_call.1} parent=1 // pred_fallthru
      _
    // Predicated region
    $region30: #{tpu_custom_call.1} parent=1 // pred_check
      _
    $region31: #{tpu_custom_call.1} parent=1 // pred_check_branch
      %84 = sbr.rel (0) target = $region33
    $region32: #{tpu_custom_call.1} parent=1 // pred_region
      %86 = dma.done [#allocation3], 256
    $region33: #{tpu_custom_call.1} parent=1 // pred_fallthru
      _
    // Predicated region
    $region34: #{tpu_custom_call.1} parent=1 // pred_check
      _
    $region35: #{tpu_custom_call.1} parent=1 // pred_check_branch
      %88 = sbr.rel (0) target = $region37
    $region36: #{tpu_custom_call.1} parent=1 // pred_region
      %90 = dma.done [#allocation6], 1024
    $region37: #{tpu_custom_call.1} parent=1 // pred_fallthru
      _
    // Predicated region
    $region38: #{tpu_custom_call.1} parent=1 // pred_check
      _
    $region39: #{tpu_custom_call.1} parent=1 // pred_check_branch
      %92 = sbr.rel (0) target = $region41
    $region40: #{tpu_custom_call.1} parent=1 // pred_region
      %94 = dma.done [#allocation6], 32
    $region41: #{tpu_custom_call.1} parent=1 // pred_fallthru
      _
    // Predicated region
    $region42: #{tpu_custom_call.1} parent=1 // pred_check
      _
    $region43: #{tpu_custom_call.1} parent=1 // pred_check_branch
      %96 = sbr.rel (0) target = $region45
    $region44: #{tpu_custom_call.1} parent=1 // pred_region
      %98 = dma.done [#allocation9], 8192
    $region45: #{tpu_custom_call.1} parent=1 // pred_fallthru
      _
    // Predicated region
    $region46: #{tpu_custom_call.1} parent=1 // pred_check
      _
    $region47: #{tpu_custom_call.1} parent=1 // pred_check_branch
      %100 = sbr.rel (0) target = $region49
    $region48: #{tpu_custom_call.1} parent=1 // pred_region
      %102 = dma.done [#allocation9], 4096
    $region49: #{tpu_custom_call.1} parent=1 // pred_fallthru
      _
    %v103 = vld [vmem:[#allocation2] sm:$0xff]
    %v104 = vld [vmem:[#allocation2 + $0x8] sm:$0xff]
    %v105 = vld [vmem:[#allocation5] sm:$0xff]
    %v106 = vld [vmem:[#allocation5 + $0x8] sm:$0xff]
    %v107 = vld [vmem:[#allocation5 + $0x10] sm:$0xff]
    %v108 = vld [vmem:[#allocation5 + $0x18] sm:$0xff]
    %v109 = vld [vmem:[#allocation5 + $0x20] sm:$0xff]
    %v110 = vld [vmem:[#allocation5 + $0x28] sm:$0xff]
    %v111 = vld [vmem:[#allocation5 + $0x30] sm:$0xff]
    %v112 = vld [vmem:[#allocation5 + $0x38] sm:$0xff]
    %v113 = vld [vmem:[#allocation7] sm:$0x3]
    %v115 = vperm.slane %v113, 0
    %v116 = vperm.slane %v113, 1
    %vm119 = vcmask 261120
    %v121 = vsel %vm119, %v103, 0
    %v124 = vsel %vm119, %v104, 0
    %126 = vmatpush.msra.mxu0 0.0
    %127 = vmatpush.msra.mxu0 0.0
    %128 = vmatpush.msra.mxu0 0.0
    %129 = vmatpush.msra.mxu0 0.0
    %130 = vmatpush.msra.mxu0 0.0
    %131 = vmatpush.msra.mxu0 0.0
    %132 = vmatpush.msra.mxu0 0.0
    %133 = vmatpush.msra.mxu0 0.0
    %134 = vmatpush.msra.mxu0 0.0
    %135 = vmatpush.msra.mxu0 0.0
    %136 = vmatpush.msra.mxu0 0.0
    %137 = vmatpush.msra.mxu0 0.0
    %138 = vmatpush.msra.mxu0 %v111
    %139 = vmatpush.msra.mxu0 %v109
    %140 = vmatpush.msra.mxu0 %v107
    %141 = vmatpush.msra.mxu0 %v105
    %142 = vmatmul.f32.gmra.mxu0 %v121
    %v143 = vpop.f32.mrf.mxu0
    %v144 = vadd.f32 %v115, %v143
    %145 = vmatmul.f32.gmra.mxu0 %v124
    %v146 = vpop.f32.mrf.mxu0
    %v147 = vadd.f32 %v115, %v146
    %148 = vdwg.mxu0
    %149 = vmatpush.msra.mxu0 0.0
    %150 = vmatpush.msra.mxu0 0.0
    %151 = vmatpush.msra.mxu0 0.0
    %152 = vmatpush.msra.mxu0 0.0
    %153 = vmatpush.msra.mxu0 0.0
    %154 = vmatpush.msra.mxu0 0.0
    %155 = vmatpush.msra.mxu0 0.0
    %156 = vmatpush.msra.mxu0 0.0
    %157 = vmatpush.msra.mxu0 0.0
    %158 = vmatpush.msra.mxu0 0.0
    %159 = vmatpush.msra.mxu0 0.0
    %160 = vmatpush.msra.mxu0 0.0
    %161 = vmatpush.msra.mxu0 %v112
    %162 = vmatpush.msra.mxu0 %v110
    %163 = vmatpush.msra.mxu0 %v108
    %164 = vmatpush.msra.mxu0 %v106
    %165 = vmatmul.f32.gmra.mxu0 %v121
    %v166 = vpop.f32.mrf.mxu0
    %v167 = vadd.f32 %v116, %v166
    %168 = vmatmul.f32.gmra.mxu0 %v124
    %v169 = vpop.f32.mrf.mxu0
    %v170 = vadd.f32 %v116, %v169
    %171 = vdwg.mxu0
    %v172 = vmax.f32 %v144, 0.0
    %v173 = vmax.f32 %v167, 0.0
    %v174 = vmax.f32 %v147, 0.0
    %v175 = vmax.f32 %v170, 0.0
    %v176 = vld [vmem:[#allocation8] sm:$0xff]
    %v177 = vld [vmem:[#allocation8 + $0x8] sm:$0xff]
    %v178 = vld [vmem:[#allocation8 + $0x10] sm:$0xff]
    %v179 = vld [vmem:[#allocation8 + $0x18] sm:$0xff]
    %v180 = vld [vmem:[#allocation8 + $0x20] sm:$0xff]
    %v181 = vld [vmem:[#allocation8 + $0x28] sm:$0xff]
    %v182 = vld [vmem:[#allocation8 + $0x30] sm:$0xff]
    %v183 = vld [vmem:[#allocation8 + $0x38] sm:$0xff]
    %v184 = vld [vmem:[#allocation8 + $0x40] sm:$0xff]
    %v185 = vld [vmem:[#allocation8 + $0x48] sm:$0xff]
    %v186 = vld [vmem:[#allocation8 + $0x50] sm:$0xff]
    %v187 = vld [vmem:[#allocation8 + $0x58] sm:$0xff]
    %v188 = vld [vmem:[#allocation8 + $0x60] sm:$0xff]
    %v189 = vld [vmem:[#allocation8 + $0x68] sm:$0xff]
    %v190 = vld [vmem:[#allocation8 + $0x70] sm:$0xff]
    %v191 = vld [vmem:[#allocation8 + $0x78] sm:$0xff]
    %v192 = vld [vmem:[#allocation8 + $0x80] sm:$0xff]
    %v193 = vld [vmem:[#allocation8 + $0x88] sm:$0xff]
    %v194 = vld [vmem:[#allocation8 + $0x90] sm:$0xff]
    %v195 = vld [vmem:[#allocation8 + $0x98] sm:$0xff]
    %v196 = vld [vmem:[#allocation8 + $0xa0] sm:$0xff]
    %v197 = vld [vmem:[#allocation8 + $0xa8] sm:$0xff]
    %v198 = vld [vmem:[#allocation8 + $0xb0] sm:$0xff]
    %v199 = vld [vmem:[#allocation8 + $0xb8] sm:$0xff]
    %v200 = vld [vmem:[#allocation8 + $0xc0] sm:$0xff]
    %v201 = vld [vmem:[#allocation8 + $0xc8] sm:$0xff]
    %v202 = vld [vmem:[#allocation8 + $0xd0] sm:$0xff]
    %v203 = vld [vmem:[#allocation8 + $0xd8] sm:$0xff]
    %v204 = vld [vmem:[#allocation8 + $0xe0] sm:$0xff]
    %v205 = vld [vmem:[#allocation8 + $0xe8] sm:$0xff]
    %v206 = vld [vmem:[#allocation8 + $0xf0] sm:$0xff]
    %v207 = vld [vmem:[#allocation8 + $0xf8] sm:$0xff]
    %v208 = vld [vmem:[#allocation8 + $0x100] sm:$0xff]
    %v209 = vld [vmem:[#allocation8 + $0x108] sm:$0xff]
    %v210 = vld [vmem:[#allocation8 + $0x110] sm:$0xff]
    %v211 = vld [vmem:[#allocation8 + $0x118] sm:$0xff]
    %v212 = vld [vmem:[#allocation8 + $0x120] sm:$0xff]
    %v213 = vld [vmem:[#allocation8 + $0x128] sm:$0xff]
    %v214 = vld [vmem:[#allocation8 + $0x130] sm:$0xff]
    %v215 = vld [vmem:[#allocation8 + $0x138] sm:$0xff]
    %v216 = vld [vmem:[#allocation8 + $0x140] sm:$0xff]
    %v217 = vld [vmem:[#allocation8 + $0x148] sm:$0xff]
    %v218 = vld [vmem:[#allocation8 + $0x150] sm:$0xff]
    %v219 = vld [vmem:[#allocation8 + $0x158] sm:$0xff]
    %v220 = vld [vmem:[#allocation8 + $0x160] sm:$0xff]
    %v221 = vld [vmem:[#allocation8 + $0x168] sm:$0xff]
    %v222 = vld [vmem:[#allocation8 + $0x170] sm:$0xff]
    %v223 = vld [vmem:[#allocation8 + $0x178] sm:$0xff]
    %v224 = vld [vmem:[#allocation8 + $0x180] sm:$0xff]
    %v225 = vld [vmem:[#allocation8 + $0x188] sm:$0xff]
    %v226 = vld [vmem:[#allocation8 + $0x190] sm:$0xff]
    %v227 = vld [vmem:[#allocation8 + $0x198] sm:$0xff]
    %v228 = vld [vmem:[#allocation8 + $0x1a0] sm:$0xff]
    %v229 = vld [vmem:[#allocation8 + $0x1a8] sm:$0xff]
    %v230 = vld [vmem:[#allocation8 + $0x1b0] sm:$0xff]
    %v231 = vld [vmem:[#allocation8 + $0x1b8] sm:$0xff]
    %v232 = vld [vmem:[#allocation8 + $0x1c0] sm:$0xff]
    %v233 = vld [vmem:[#allocation8 + $0x1c8] sm:$0xff]
    %v234 = vld [vmem:[#allocation8 + $0x1d0] sm:$0xff]
    %v235 = vld [vmem:[#allocation8 + $0x1d8] sm:$0xff]
    %v236 = vld [vmem:[#allocation8 + $0x1e0] sm:$0xff]
    %v237 = vld [vmem:[#allocation8 + $0x1e8] sm:$0xff]
    %v238 = vld [vmem:[#allocation8 + $0x1f0] sm:$0xff]
    %v239 = vld [vmem:[#allocation8 + $0x1f8] sm:$0xff]
    %v240 = vld [vmem:[%s4] sm:$0x3]
    %v242 = vperm.slane %v240, 0
    %v243 = vperm.slane %v240, 1
    %246 = vmatpush.msra.mxu0 %v206
    %247 = vmatpush.msra.mxu0 %v204
    %248 = vmatpush.msra.mxu0 %v202
    %249 = vmatpush.msra.mxu0 %v200
    %250 = vmatpush.msra.mxu0 %v198
    %251 = vmatpush.msra.mxu0 %v196
    %252 = vmatpush.msra.mxu0 %v194
    %253 = vmatpush.msra.mxu0 %v192
    %254 = vmatpush.msra.mxu0 %v190
    %255 = vmatpush.msra.mxu0 %v188
    %256 = vmatpush.msra.mxu0 %v186
    %257 = vmatpush.msra.mxu0 %v184
    %258 = vmatpush.msra.mxu0 %v182
    %259 = vmatpush.msra.mxu0 %v180
    %260 = vmatpush.msra.mxu0 %v178
    %261 = vmatpush.msra.mxu0 %v176
    %262 = vmatmul.f32.gmra.mxu0 %v172
    %v263 = vpop.f32.mrf.mxu0
    %v264 = vadd.f32 %v242, %v263
    %265 = vmatmul.f32.gmra.mxu0 %v174
    %v266 = vpop.f32.mrf.mxu0
    %v267 = vadd.f32 %v242, %v266
    %268 = vdwg.mxu0
    %269 = vmatpush.msra.mxu0 %v238
    %270 = vmatpush.msra.mxu0 %v236
    %271 = vmatpush.msra.mxu0 %v234
    %272 = vmatpush.msra.mxu0 %v232
    %273 = vmatpush.msra.mxu0 %v230
    %274 = vmatpush.msra.mxu0 %v228
    %275 = vmatpush.msra.mxu0 %v226
    %276 = vmatpush.msra.mxu0 %v224
    %277 = vmatpush.msra.mxu0 %v222
    %278 = vmatpush.msra.mxu0 %v220
    %279 = vmatpush.msra.mxu0 %v218
    %280 = vmatpush.msra.mxu0 %v216
    %281 = vmatpush.msra.mxu0 %v214
    %282 = vmatpush.msra.mxu0 %v212
    %283 = vmatpush.msra.mxu0 %v210
    %284 = vmatpush.msra.mxu0 %v208
    %285 = vmatmul.f32.gmra.mxu0 %v173
    %v286 = vpop.f32.mrf.mxu0
    %v287 = vadd.f32 %v264, %v286
    %288 = vmatmul.f32.gmra.mxu0 %v175
    %v289 = vpop.f32.mrf.mxu0
    %v290 = vadd.f32 %v267, %v289
    %291 = vdwg.mxu0
    %292 = vmatpush.msra.mxu0 %v207
    %293 = vmatpush.msra.mxu0 %v205
    %294 = vmatpush.msra.mxu0 %v203
    %295 = vmatpush.msra.mxu0 %v201
    %296 = vmatpush.msra.mxu0 %v199
    %297 = vmatpush.msra.mxu0 %v197
    %298 = vmatpush.msra.mxu0 %v195
    %299 = vmatpush.msra.mxu0 %v193
    %300 = vmatpush.msra.mxu0 %v191
    %301 = vmatpush.msra.mxu0 %v189
    %302 = vmatpush.msra.mxu0 %v187
    %303 = vmatpush.msra.mxu0 %v185
    %304 = vmatpush.msra.mxu0 %v183
    %305 = vmatpush.msra.mxu0 %v181
    %306 = vmatpush.msra.mxu0 %v179
    %307 = vmatpush.msra.mxu0 %v177
    %308 = vmatmul.f32.gmra.mxu0 %v172
    %v309 = vpop.f32.mrf.mxu0
    %v310 = vadd.f32 %v243, %v309
    %311 = vmatmul.f32.gmra.mxu0 %v174
    %v312 = vpop.f32.mrf.mxu0
    %v313 = vadd.f32 %v243, %v312
    %314 = vdwg.mxu0
    %315 = vmatpush.msra.mxu0 %v239
    %316 = vmatpush.msra.mxu0 %v237
    %317 = vmatpush.msra.mxu0 %v235
    %318 = vmatpush.msra.mxu0 %v233
    %319 = vmatpush.msra.mxu0 %v231
    %320 = vmatpush.msra.mxu0 %v229
    %321 = vmatpush.msra.mxu0 %v227
    %322 = vmatpush.msra.mxu0 %v225
    %323 = vmatpush.msra.mxu0 %v223
    %324 = vmatpush.msra.mxu0 %v221
    %325 = vmatpush.msra.mxu0 %v219
    %326 = vmatpush.msra.mxu0 %v217
    %327 = vmatpush.msra.mxu0 %v215
    %328 = vmatpush.msra.mxu0 %v213
    %329 = vmatpush.msra.mxu0 %v211
    %330 = vmatpush.msra.mxu0 %v209
    %331 = vmatmul.f32.gmra.mxu0 %v173
    %v332 = vpop.f32.mrf.mxu0
    %v333 = vadd.f32 %v310, %v332
    %334 = vmatmul.f32.gmra.mxu0 %v175
    %v335 = vpop.f32.mrf.mxu0
    %v336 = vadd.f32 %v313, %v335
    %337 = vdwg.mxu0
    %v338 = vmax.f32 %v287, 0.0
    %v339 = vmax.f32 %v333, 0.0
    %v340 = vmax.f32 %v290, 0.0
    %v341 = vmax.f32 %v336, 0.0
    %v342 = vld [vmem:[#allocation10] sm:$0xff]
    %v343 = vld [vmem:[#allocation10 + $0x8] sm:$0xff]
    %v344 = vld [vmem:[#allocation10 + $0x10] sm:$0xff]
    %v345 = vld [vmem:[#allocation10 + $0x18] sm:$0xff]
    %v346 = vld [vmem:[#allocation10 + $0x20] sm:$0xff]
    %v347 = vld [vmem:[#allocation10 + $0x28] sm:$0xff]
    %v348 = vld [vmem:[#allocation10 + $0x30] sm:$0xff]
    %v349 = vld [vmem:[#allocation10 + $0x38] sm:$0xff]
    %v350 = vld [vmem:[#allocation10 + $0x40] sm:$0xff]
    %v351 = vld [vmem:[#allocation10 + $0x48] sm:$0xff]
    %v352 = vld [vmem:[#allocation10 + $0x50] sm:$0xff]
    %v353 = vld [vmem:[#allocation10 + $0x58] sm:$0xff]
    %v354 = vld [vmem:[#allocation10 + $0x60] sm:$0xff]
    %v355 = vld [vmem:[#allocation10 + $0x68] sm:$0xff]
    %v356 = vld [vmem:[#allocation10 + $0x70] sm:$0xff]
    %v357 = vld [vmem:[#allocation10 + $0x78] sm:$0xff]
    %v358 = vld [vmem:[#allocation10 + $0x80] sm:$0xff]
    %v359 = vld [vmem:[#allocation10 + $0x88] sm:$0xff]
    %v360 = vld [vmem:[#allocation10 + $0x90] sm:$0xff]
    %v361 = vld [vmem:[#allocation10 + $0x98] sm:$0xff]
    %v362 = vld [vmem:[#allocation10 + $0xa0] sm:$0xff]
    %v363 = vld [vmem:[#allocation10 + $0xa8] sm:$0xff]
    %v364 = vld [vmem:[#allocation10 + $0xb0] sm:$0xff]
    %v365 = vld [vmem:[#allocation10 + $0xb8] sm:$0xff]
    %v366 = vld [vmem:[#allocation10 + $0xc0] sm:$0xff]
    %v367 = vld [vmem:[#allocation10 + $0xc8] sm:$0xff]
    %v368 = vld [vmem:[#allocation10 + $0xd0] sm:$0xff]
    %v369 = vld [vmem:[#allocation10 + $0xd8] sm:$0xff]
    %v370 = vld [vmem:[#allocation10 + $0xe0] sm:$0xff]
    %v371 = vld [vmem:[#allocation10 + $0xe8] sm:$0xff]
    %v372 = vld [vmem:[#allocation10 + $0xf0] sm:$0xff]
    %v373 = vld [vmem:[#allocation10 + $0xf8] sm:$0xff]
    %v374 = vld [vmem:[%s6] sm:$0x1]
    %v376 = vperm.slane %v374, 0
    %378 = vmatpush.msra.mxu0 %v357
    %379 = vmatpush.msra.mxu0 %v356
    %380 = vmatpush.msra.mxu0 %v355
    %381 = vmatpush.msra.mxu0 %v354
    %382 = vmatpush.msra.mxu0 %v353
    %383 = vmatpush.msra.mxu0 %v352
    %384 = vmatpush.msra.mxu0 %v351
    %385 = vmatpush.msra.mxu0 %v350
    %386 = vmatpush.msra.mxu0 %v349
    %387 = vmatpush.msra.mxu0 %v348
    %388 = vmatpush.msra.mxu0 %v347
    %389 = vmatpush.msra.mxu0 %v346
    %390 = vmatpush.msra.mxu0 %v345
    %391 = vmatpush.msra.mxu0 %v344
    %392 = vmatpush.msra.mxu0 %v343
    %393 = vmatpush.msra.mxu0 %v342
    %394 = vmatmul.f32.gmra.mxu0 %v338
    %v395 = vpop.f32.mrf.mxu0
    %v396 = vadd.f32 %v376, %v395
    %397 = vmatmul.f32.gmra.mxu0 %v340
    %v398 = vpop.f32.mrf.mxu0
    %v399 = vadd.f32 %v376, %v398
    %400 = vdwg.mxu0
    %401 = vmatpush.msra.mxu0 %v373
    %402 = vmatpush.msra.mxu0 %v372
    %403 = vmatpush.msra.mxu0 %v371
    %404 = vmatpush.msra.mxu0 %v370
    %405 = vmatpush.msra.mxu0 %v369
    %406 = vmatpush.msra.mxu0 %v368
    %407 = vmatpush.msra.mxu0 %v367
    %408 = vmatpush.msra.mxu0 %v366
    %409 = vmatpush.msra.mxu0 %v365
    %410 = vmatpush.msra.mxu0 %v364
    %411 = vmatpush.msra.mxu0 %v363
    %412 = vmatpush.msra.mxu0 %v362
    %413 = vmatpush.msra.mxu0 %v361
    %414 = vmatpush.msra.mxu0 %v360
    %415 = vmatpush.msra.mxu0 %v359
    %416 = vmatpush.msra.mxu0 %v358
    %417 = vmatmul.f32.gmra.mxu0 %v339
    %v418 = vpop.f32.mrf.mxu0
    %v419 = vadd.f32 %v396, %v418
    %420 = vmatmul.f32.gmra.mxu0 %v341
    %v421 = vpop.f32.mrf.mxu0
    %v422 = vadd.f32 %v399, %v421
    %423 = vdwg.mxu0
    %424 = vst [vmem:[#allocation11] sm:$0xff] %v419
    %425 = vst [vmem:[#allocation11 + $0x8] sm:$0xff] %v422
    // Predicated region
    $region50: #{tpu_custom_call.1} parent=1 // pred_check
      _
    $region51: #{tpu_custom_call.1} parent=1 // pred_check_branch
      %427 = sbr.rel (0) target = $region53
    $region52: #{tpu_custom_call.1} parent=1 // pred_region
      %429 = vsyncadd [#allocation4], 0
      %s430 = sshll.u32 [#allocation11], 4
      %s431 = int_to_ptr.vmem [resolvable:$true] %s430
      %s432 = sshll.u32 %s7, 4
      %s433 = int_to_ptr.hbm [resolvable:$true] %s432
      %438 = dma.vmem_to_hbm [thread:$0]  %s431, 256, %s433, [#allocation4], 128, 128, 8
    $region53: #{tpu_custom_call.1} parent=1 // pred_fallthru
      _
    // Predicated region
    $region54: #{tpu_custom_call.1} parent=1 // pred_check
      _
    $region55: #{tpu_custom_call.1} parent=1 // pred_check_branch
      %440 = sbr.rel (0) target = $region57
    $region56: #{tpu_custom_call.1} parent=1 // pred_region
      %442 = dma.done [#allocation4], 256
    $region57: #{tpu_custom_call.1} parent=1 // pred_fallthru
      _
    %443 = vsyncpa [#allocation3], 1
    %444 = vsyncpa [#allocation6], 1
    %445 = vsyncpa [#allocation9], 1
    %446 = vsyncpa [#allocation4], 1

</llo_original>
